<compile_context>
chip_gen: v7x
topology: tpu7x:2x2x1
jax: 0.10.0
libtpu: 0.0.40
codegen_flags: <defaults>
</compile_context>

<pallas_src>
import functools

import jax
import jax.numpy as jnp
from jax.experimental import pallas as pl
from jax.experimental.pallas import tpu as pltpu


def _round_up(x, m):
    return (x + m - 1) // m * m


def _cdiv(a, b):
    return -(-a // b)


# --------------------------------------------------------------------------
# Kernel factory (specialized at trace time on memory path / layer-2 form)
# --------------------------------------------------------------------------
def _make_mlp_base_kernel(has_memory: bool, fuse_layer2: bool):

    def kernel(*refs):
        it = iter(refs)
        x_ref = next(it)
        m_ref = next(it) if has_memory else None
        w1_in_ref = next(it)
        w1_mem_ref = next(it) if has_memory else None
        b1_ref = next(it)
        if fuse_layer2:
            w2_ref = next(it)
            wc2_ref = wa2_ref = None
        else:
            wc2_ref = next(it)
            wa2_ref = next(it)
            w2_ref = None
        b2_ref = next(it)
        wv_ref = next(it)
        bv_ref = next(it)
        value_ref = next(it)
        actor_ref = next(it)

        Hp = actor_ref.shape[1]

        # ---- Layer 1: fused [critic | actor] trunks, split-K over the two
        #      input sources (no wrapper-side concat), bf16 MXU / f32 acc.
        x = x_ref[...].astype(jnp.bfloat16)
        h1 = jnp.dot(x, w1_in_ref[...], preferred_element_type=jnp.float32)
        if has_memory:
            m = m_ref[...].astype(jnp.bfloat16)
            h1 = h1 + jnp.dot(m, w1_mem_ref[...],
                              preferred_element_type=jnp.float32)
        # Bias in f32, tanh in bf16 (consumed by a bf16 matmul next).
        h1 = jnp.tanh((h1 + b1_ref[...]).astype(jnp.bfloat16))   # (tb, 2Hp) bf16

        # ---- Layer 2
        if fuse_layer2:
            # Block-diagonal (2Hp, 2Hp): one full-depth MXU pass on v6e/v7x.
            h2 = jnp.dot(h1, w2_ref[...], preferred_element_type=jnp.float32)
        else:
            # Split form (preferable on v5e's 128x128 MXU).
            h2 = jnp.concatenate(
                [jnp.dot(h1[:, :Hp], wc2_ref[...],
                         preferred_element_type=jnp.float32),
                 jnp.dot(h1[:, Hp:], wa2_ref[...],
                         preferred_element_type=jnp.float32)],
                axis=-1)
        h2 = jnp.tanh((h2 + b2_ref[...]).astype(jnp.bfloat16))   # (tb, 2Hp) bf16

        hc2 = h2[:, :Hp]                                         # critic hidden
        ha2 = h2[:, Hp:]                                         # actor hidden

        # ---- critic_linear (N=1): VPU multiply + lane reduction (no MXU).
        value_ref[...] = (jnp.sum(hc2.astype(jnp.float32) * wv_ref[...],
                                  axis=-1, keepdims=True) + bv_ref[...])
        actor_ref[...] = ha2.astype(actor_ref.dtype)

    return kernel


# --------------------------------------------------------------------------
# Wrapper
# --------------------------------------------------------------------------
def mlp_base_forward(inputs, actions_memory, params, *, hidden_size,
                     block_rows=2048, fuse_layer2=True,
                     actor_out_dtype=jnp.bfloat16):
    """MLPBase.forward -> (value (B,1) f32, hidden_actor (B,H) actor_out_dtype).

    `hidden_size` must be a static Python int (bind via functools.partial)."""
    B, num_inputs = inputs.shape
    H = int(hidden_size)
    Hp = params["b2"].shape[1] // 2
    has_memory = actions_memory is not None

    # ---- Batch tiling -------------------------------------------------------
    n_tiles = _cdiv(B, block_rows)
    if n_tiles == 1 and B >= 64:
        n_tiles = 2                         # keep v7x's second TensorCore busy
    tb = _round_up(_cdiv(B, n_tiles), 8)    # per-tile zero padding stays small
    Bp = _round_up(B, tb)
    if Bp != B:
        pad = Bp - B
        inputs = jnp.pad(inputs, ((0, pad), (0, 0)))
        if has_memory:
            actions_memory = jnp.pad(actions_memory, ((0, pad), (0, 0)))
    grid = (Bp // tb,)

    def row_spec(cols):
        return pl.BlockSpec((tb, cols), lambda i: (i, 0))

    def const_spec(arr):
        return pl.BlockSpec(arr.shape, lambda i: (0, 0))

    args, in_specs = [inputs], [row_spec(num_inputs)]
    if has_memory:
        args.append(actions_memory)
        in_specs.append(row_spec(actions_memory.shape[1]))
    args.append(params["w1_in"]); in_specs.append(const_spec(params["w1_in"]))
    if has_memory:
        args.append(params["w1_mem"]); in_specs.append(const_spec(params["w1_mem"]))
    args.append(params["b1"]); in_specs.append(const_spec(params["b1"]))
    if fuse_layer2:
        args.append(params["w2"]); in_specs.append(const_spec(params["w2"]))
    else:
        args.append(params["wc2"]); in_specs.append(const_spec(params["wc2"]))
        args.append(params["wa2"]); in_specs.append(const_spec(params["wa2"]))
    args.append(params["b2"]); in_specs.append(const_spec(params["b2"]))
    args.append(params["wv"]); in_specs.append(const_spec(params["wv"]))
    args.append(params["bv"]); in_specs.append(const_spec(params["bv"]))

    # ---- Cost estimate (scheduling hint for the surrounding XLA graph) ------
    d_in = num_inputs + (actions_memory.shape[1] if has_memory else 0)
    k2 = 2 * Hp if fuse_layer2 else Hp
    flops = 2 * Bp * (d_in * 2 * Hp + 2 * Hp * k2 + Hp)
    transcendentals = 4 * Bp * Hp
    bytes_accessed = (sum(int(a.size) * a.dtype.itemsize for a in args)
                      + Bp * 4
                      + Bp * Hp * jnp.dtype(actor_out_dtype).itemsize)

    value_p, actor_p = pl.pallas_call(
        _make_mlp_base_kernel(has_memory, fuse_layer2),
        out_shape=(
            jax.ShapeDtypeStruct((Bp, 1), jnp.float32),
            jax.ShapeDtypeStruct((Bp, Hp), actor_out_dtype),
        ),
        grid=grid,
        in_specs=in_specs,
        out_specs=(
            pl.BlockSpec((tb, 1), lambda i: (i, 0)),
            pl.BlockSpec((tb, Hp), lambda i: (i, 0)),
        ),
        compiler_params=pltpu.CompilerParams(
            dimension_semantics=("parallel",),
            # v5e's default scoped VMEM (~16 MiB) is too small for big tiles;
            # 48 MiB stays under v7x's 64 MiB physical budget.
            vmem_limit_bytes=48 * 1024 * 1024,
        ),
        cost_estimate=pl.CostEstimate(
            flops=flops,
            transcendentals=transcendentals,
            bytes_accessed=bytes_accessed),
    )(*args)

    # Slice only when actually needed; all indices are static Python ints.
    value = value_p if Bp == B else value_p[:B]
    actor = actor_p if (Bp == B and Hp == H) else actor_p[:B, :H]
    return value, actor


# --------------------------------------------------------------------------
# Parameter construction (PyTorch layout) and packing for the kernel
# --------------------------------------------------------------------------
def _init_normc(key, out_features, in_features):
    """misc.init_normc_ on a PyTorch (out, in) weight."""
    w = jax.random.normal(key, (out_features, in_features), dtype=jnp.float32)
    return w / jnp.sqrt(jnp.sum(w * w, axis=1, keepdims=True))


def make_raw_params(key, num_inputs, hidden_size, action_memory):
    """Torch-layout (out, in) f32 weights + (out,) biases, init like MLPBase."""
    d_in = num_inputs + action_memory
    keys = jax.random.split(key, 5)
    return {
        "wc1": _init_normc(keys[0], hidden_size, d_in),
        "bc1": jnp.zeros((hidden_size,), jnp.float32),
        "wc2": _init_normc(keys[1], hidden_size, hidden_size),
        "bc2": jnp.zeros((hidden_size,), jnp.float32),
        "wv": _init_normc(keys[2], 1, hidden_size),
        "bv": jnp.zeros((1,), jnp.float32),
        "wa1": _init_normc(keys[3], hidden_size, d_in),
        "ba1": jnp.zeros((hidden_size,), jnp.float32),
        "wa2": _init_normc(keys[4], hidden_size, hidden_size),
        "ba2": jnp.zeros((hidden_size,), jnp.float32),
    }


def pack_params(raw, num_inputs, hidden_size, action_memory, *, fuse_layer2=True):
    """Pad to lane-dense shapes, fuse layer-1 [critic|actor] (and optionally a
    block-diagonal layer-2), cast matmul weights to bf16.  Arrays only."""
    H = hidden_size
    Hp = _round_up(H, 128)

    # Torch (out, in) -> (in, out) for y = x @ W.
    wc1_t = raw["wc1"].T   # (d_in, H)
    wa1_t = raw["wa1"].T
    wc2_t = raw["wc2"].T   # (H, H)
    wa2_t = raw["wa2"].T

    w1_in = jnp.zeros((num_inputs, 2 * Hp), jnp.float32)
    w1_in = w1_in.at[:, :H].set(wc1_t[:num_inputs])
    w1_in = w1_in.at[:, Hp:Hp + H].set(wa1_t[:num_inputs])

    b1 = jnp.zeros((1, 2 * Hp), jnp.float32)
    b1 = b1.at[0, :H].set(raw["bc1"]).at[0, Hp:Hp + H].set(raw["ba1"])
    b2 = jnp.zeros((1, 2 * Hp), jnp.float32)
    b2 = b2.at[0, :H].set(raw["bc2"]).at[0, Hp:Hp + H].set(raw["ba2"])

    wv = jnp.zeros((1, Hp), jnp.float32).at[0, :H].set(raw["wv"][0])
    bv = raw["bv"].reshape(1, 1)

    params = {"w1_in": w1_in.astype(jnp.bfloat16),
              "b1": b1, "b2": b2, "wv": wv, "bv": bv}

    if action_memory > 0:
        w1_mem = jnp.zeros((action_memory, 2 * Hp), jnp.float32)
        w1_mem = w1_mem.at[:, :H].set(wc1_t[num_inputs:])
        w1_mem = w1_mem.at[:, Hp:Hp + H].set(wa1_t[num_inputs:])
        params["w1_mem"] = w1_mem.astype(jnp.bfloat16)

    wc2 = jnp.zeros((Hp, Hp), jnp.float32).at[:H, :H].set(wc2_t)
    wa2 = jnp.zeros((Hp, Hp), jnp.float32).at[:H, :H].set(wa2_t)
    if fuse_layer2:
        w2 = jnp.zeros((2 * Hp, 2 * Hp), jnp.float32)
        w2 = w2.at[:Hp, :Hp].set(wc2).at[Hp:, Hp:].set(wa2)
        params["w2"] = w2.astype(jnp.bfloat16)
    else:
        params["wc2"] = wc2.astype(jnp.bfloat16)
        params["wa2"] = wa2.astype(jnp.bfloat16)

    return params


# --------------------------------------------------------------------------
# References for self-test
# --------------------------------------------------------------------------
def _reference_f32(inputs, actions_memory, raw):
    x = (jnp.concatenate([inputs, actions_memory], axis=1)
         if actions_memory is not None else inputs)
    hc = jnp.tanh(x @ raw["wc1"].T + raw["bc1"])
    hc = jnp.tanh(hc @ raw["wc2"].T + raw["bc2"])
    value = hc @ raw["wv"].T + raw["bv"]
    ha = jnp.tanh(x @ raw["wa1"].T + raw["ba1"])
    ha = jnp.tanh(ha @ raw["wa2"].T + raw["ba2"])
    return value, ha


def _reference_kernel_math(inputs, actions_memory, p, hidden_size, fuse_layer2=True):
    """Pure-JAX model of the kernel's bf16-matmul / bf16-tanh math."""
    H = hidden_size
    Hp = p["b2"].shape[1] // 2
    h1 = jnp.dot(inputs.astype(jnp.bfloat16), p["w1_in"],
                 preferred_element_type=jnp.float32)
    if actions_memory is not None and "w1_mem" in p:
        h1 = h1 + jnp.dot(actions_memory.astype(jnp.bfloat16), p["w1_mem"],
                          preferred_element_type=jnp.float32)
    h1 = jnp.tanh((h1 + p["b1"]).astype(jnp.bfloat16))
    if fuse_layer2:
        h2 = jnp.dot(h1, p["w2"], preferred_element_type=jnp.float32)
    else:
        h2 = jnp.concatenate(
            [jnp.dot(h1[:, :Hp], p["wc2"], preferred_element_type=jnp.float32),
             jnp.dot(h1[:, Hp:], p["wa2"], preferred_element_type=jnp.float32)],
            axis=-1)
    h2 = jnp.tanh((h2 + p["b2"]).astype(jnp.bfloat16))
    hc2, ha2 = h2[:, :Hp], h2[:, Hp:]
    value = jnp.sum(hc2.astype(jnp.float32) * p["wv"], axis=-1, keepdims=True) + p["bv"]
    return value, ha2[:, :H].astype(jnp.float32)


# --------------------------------------------------------------------------
if __name__ == "__main__":
    key = jax.random.PRNGKey(0)
    k_in, k_mem, k_par = jax.random.split(key, 3)

    batch = 8
    num_inputs = 16
    action_memory = 4
    hidden_size = 32

    inputs = jax.random.normal(k_in, (batch, num_inputs), dtype=jnp.float32)
    actions_memory = jax.random.normal(k_mem, (batch, action_memory), dtype=jnp.float32)

    raw = make_raw_params(k_par, num_inputs, hidden_size, action_memory)
    packed = pack_params(raw, num_inputs, hidden_size, action_memory, fuse_layer2=True)

    fwd = jax.jit(functools.partial(mlp_base_forward, hidden_size=hidden_size,
                                    block_rows=2048, fuse_layer2=True))
    value, hidden_actor = fwd(inputs, actions_memory, packed)
    jax.block_until_ready((value, hidden_actor))

    assert value.shape == (batch, 1), value.shape
    assert hidden_actor.shape == (batch, hidden_size), hidden_actor.shape

    value_f32 = value.astype(jnp.float32)
    actor_f32 = hidden_actor.astype(jnp.float32)

    # Tight check vs a pure-JAX model of the same bf16 math (kernel correctness).
    v_b, a_b = _reference_kernel_math(inputs, actions_memory, packed, hidden_size)
    assert jnp.allclose(value_f32, v_b, atol=2e-2, rtol=2e-2)
    assert jnp.allclose(actor_f32, a_b, atol=2e-2, rtol=2e-2)

    # Loose check vs the full-f32 PyTorch-equivalent reference (packing/semantics).
    v_f, a_f = _reference_f32(inputs, actions_memory, raw)
    assert jnp.allclose(value_f32, v_f, atol=7e-2, rtol=7e-2)
    assert jnp.allclose(actor_f32, a_f, atol=7e-2, rtol=7e-2)

    # Also exercise the no-memory specialization (actions_memory is None).
    raw0 = make_raw_params(k_par, num_inputs, hidden_size, 0)
    packed0 = pack_params(raw0, num_inputs, hidden_size, 0, fuse_layer2=True)
    fwd0 = jax.jit(functools.partial(mlp_base_forward, hidden_size=hidden_size))
    v0, a0 = fwd0(inputs, None, packed0)
    jax.block_until_ready((v0, a0))
    assert v0.shape == (batch, 1) and a0.shape == (batch, hidden_size)
    v0_ref, a0_ref = _reference_f32(inputs, None, raw0)
    assert jnp.allclose(v0.astype(jnp.float32), v0_ref, atol=7e-2, rtol=7e-2)
    assert jnp.allclose(a0.astype(jnp.float32), a0_ref, atol=7e-2, rtol=7e-2)

    print("KERNEL_OK")
</pallas_src>

<mosaic_0001>
module attributes {stable_mosaic.version = 11 : i64} {
  func.func @kernel(%arg0: i32, %arg1: memref<8x16xf32, #tpu.memory_space<vmem>>, %arg2: memref<8x4xf32, #tpu.memory_space<vmem>>, %arg3: memref<16x256xbf16, #tpu.memory_space<vmem>>, %arg4: memref<4x256xbf16, #tpu.memory_space<vmem>>, %arg5: memref<1x256xf32, #tpu.memory_space<vmem>>, %arg6: memref<256x256xbf16, #tpu.memory_space<vmem>>, %arg7: memref<1x256xf32, #tpu.memory_space<vmem>>, %arg8: memref<1x128xf32, #tpu.memory_space<vmem>>, %arg9: memref<1x1xf32, #tpu.memory_space<vmem>>, %arg10: memref<8x1xf32, #tpu.memory_space<vmem>>, %arg11: memref<8x128xbf16, #tpu.memory_space<vmem>>) attributes {dimension_semantics = [#tpu.dimension_semantics<parallel>], iteration_bounds = array<i64: 1>, scalar_prefetch = 0 : i64, scratch_operands = 0 : i64, tpu.core_type = #tpu.core_type<tc>, window_params = [{transform_indices = @transform_0, window_bounds = array<i64: 8, 16>}, {transform_indices = @transform_1, window_bounds = array<i64: 8, 4>}, {pipeline_mode = #tpu.pipeline_mode<synchronous>, transform_indices = @transform_2, window_bounds = array<i64: 16, 256>}, {pipeline_mode = #tpu.pipeline_mode<synchronous>, transform_indices = @transform_3, window_bounds = array<i64: 4, 256>}, {pipeline_mode = #tpu.pipeline_mode<synchronous>, transform_indices = @transform_4, window_bounds = array<i64: 1, 256>}, {pipeline_mode = #tpu.pipeline_mode<synchronous>, transform_indices = @transform_5, window_bounds = array<i64: 256, 256>}, {pipeline_mode = #tpu.pipeline_mode<synchronous>, transform_indices = @transform_6, window_bounds = array<i64: 1, 256>}, {pipeline_mode = #tpu.pipeline_mode<synchronous>, transform_indices = @transform_7, window_bounds = array<i64: 1, 128>}, {pipeline_mode = #tpu.pipeline_mode<synchronous>, transform_indices = @transform_8, window_bounds = array<i64: 1, 1>}, {transform_indices = @transform_9, window_bounds = array<i64: 8, 1>}, {transform_indices = @transform_10, window_bounds = array<i64: 8, 128>}]} {
    %c0 = arith.constant 0 : index
    %c0_0 = arith.constant 0 : index
    %0 = vector.load %arg1[%c0, %c0_0] : memref<8x16xf32, #tpu.memory_space<vmem>>, vector<8x16xf32>
    %1 = arith.truncf %0 : vector<8x16xf32> to vector<8x16xbf16>
    %c0_1 = arith.constant 0 : index
    %c0_2 = arith.constant 0 : index
    %2 = vector.load %arg3[%c0_1, %c0_2] : memref<16x256xbf16, #tpu.memory_space<vmem>>, vector<16x256xbf16>
    %cst = arith.constant dense<0.000000e+00> : vector<8x256xf32>
    %3 = tpu.matmul %1, %2, %cst {dimension_numbers = #tpu.dot_dimension_numbers<[1], [0], [0], [1], [0, 0, 1, 1], [], []>} : vector<8x16xbf16>, vector<16x256xbf16>, vector<8x256xf32> -> vector<8x256xf32>
    %c0_3 = arith.constant 0 : index
    %c0_4 = arith.constant 0 : index
    %4 = vector.load %arg2[%c0_3, %c0_4] : memref<8x4xf32, #tpu.memory_space<vmem>>, vector<8x4xf32>
    %5 = arith.truncf %4 : vector<8x4xf32> to vector<8x4xbf16>
    %c0_5 = arith.constant 0 : index
    %c0_6 = arith.constant 0 : index
    %6 = vector.load %arg4[%c0_5, %c0_6] : memref<4x256xbf16, #tpu.memory_space<vmem>>, vector<4x256xbf16>
    %cst_7 = arith.constant dense<0.000000e+00> : vector<8x256xf32>
    %7 = tpu.matmul %5, %6, %cst_7 {dimension_numbers = #tpu.dot_dimension_numbers<[1], [0], [0], [1], [0, 0, 1, 1], [], []>} : vector<8x4xbf16>, vector<4x256xbf16>, vector<8x256xf32> -> vector<8x256xf32>
    %8 = arith.addf %3, %7 : vector<8x256xf32>
    %c0_8 = arith.constant 0 : index
    %c0_9 = arith.constant 0 : index
    %9 = vector.load %arg5[%c0_8, %c0_9] : memref<1x256xf32, #tpu.memory_space<vmem>>, vector<1x256xf32>
    %10 = vector.broadcast %9 : vector<1x256xf32> to vector<8x256xf32>
    %11 = arith.addf %8, %10 : vector<8x256xf32>
    %12 = arith.truncf %11 : vector<8x256xf32> to vector<8x256xbf16>
    %13 = math.tanh %12 : vector<8x256xbf16>
    %c0_10 = arith.constant 0 : index
    %c0_11 = arith.constant 0 : index
    %14 = vector.load %arg6[%c0_10, %c0_11] : memref<256x256xbf16, #tpu.memory_space<vmem>>, vector<256x256xbf16>
    %cst_12 = arith.constant dense<0.000000e+00> : vector<8x256xf32>
    %15 = tpu.matmul %13, %14, %cst_12 {dimension_numbers = #tpu.dot_dimension_numbers<[1], [0], [0], [1], [0, 0, 1, 1], [], []>} : vector<8x256xbf16>, vector<256x256xbf16>, vector<8x256xf32> -> vector<8x256xf32>
    %c0_13 = arith.constant 0 : index
    %c0_14 = arith.constant 0 : index
    %16 = vector.load %arg7[%c0_13, %c0_14] : memref<1x256xf32, #tpu.memory_space<vmem>>, vector<1x256xf32>
    %17 = vector.broadcast %16 : vector<1x256xf32> to vector<8x256xf32>
    %18 = arith.addf %15, %17 : vector<8x256xf32>
    %19 = arith.truncf %18 : vector<8x256xf32> to vector<8x256xbf16>
    %20 = math.tanh %19 : vector<8x256xbf16>
    %21 = vector.extract_strided_slice %20 {offsets = [0, 0], sizes = [8, 128], strides = [1, 1]} : vector<8x256xbf16> to vector<8x128xbf16>
    %22 = vector.extract_strided_slice %20 {offsets = [0, 128], sizes = [8, 128], strides = [1, 1]} : vector<8x256xbf16> to vector<8x128xbf16>
    %23 = arith.extf %21 : vector<8x128xbf16> to vector<8x128xf32>
    %c0_15 = arith.constant 0 : index
    %c0_16 = arith.constant 0 : index
    %24 = vector.load %arg8[%c0_15, %c0_16] : memref<1x128xf32, #tpu.memory_space<vmem>>, vector<1x128xf32>
    %25 = vector.broadcast %24 : vector<1x128xf32> to vector<8x128xf32>
    %26 = arith.mulf %23, %25 : vector<8x128xf32>
    %cst_17 = arith.constant dense<0.000000e+00> : vector<8xf32>
    %27 = vector.multi_reduction <add>, %26, %cst_17 [1] : vector<8x128xf32> to vector<8xf32>
    %28 = vector.shape_cast %27 : vector<8xf32> to vector<8x1xf32>
    %c0_18 = arith.constant 0 : index
    %c0_19 = arith.constant 0 : index
    %29 = vector.load %arg9[%c0_18, %c0_19] : memref<1x1xf32, #tpu.memory_space<vmem>>, vector<1x1xf32>
    %30 = vector.broadcast %29 : vector<1x1xf32> to vector<8x1xf32>
    %31 = arith.addf %28, %30 : vector<8x1xf32>
    %c0_20 = arith.constant 0 : index
    %c0_21 = arith.constant 0 : index
    %32 = vector.load %arg10[%c0_20, %c0_21] : memref<8x1xf32, #tpu.memory_space<vmem>>, vector<8x1xf32>
    tpu.vector_store %arg10[%c0_20, %c0_21], %31 {strides = array<i32>} : memref<8x1xf32, #tpu.memory_space<vmem>>, vector<8x1xf32>,
    %c0_22 = arith.constant 0 : index
    %c0_23 = arith.constant 0 : index
    %33 = vector.load %arg11[%c0_22, %c0_23] : memref<8x128xbf16, #tpu.memory_space<vmem>>, vector<8x128xbf16>
    tpu.vector_store %arg11[%c0_22, %c0_23], %22 {strides = array<i32>} : memref<8x128xbf16, #tpu.memory_space<vmem>>, vector<8x128xbf16>,
    return
  }
  func.func @transform_0(%arg0: i32) -> (i32, i32) {
    %c0_i32 = arith.constant 0 : i32
    %c0_i32_0 = arith.constant 0 : i32
    return %arg0, %c0_i32 : i32, i32
  }
  func.func @transform_1(%arg0: i32) -> (i32, i32) {
    %c0_i32 = arith.constant 0 : i32
    %c0_i32_0 = arith.constant 0 : i32
    return %arg0, %c0_i32 : i32, i32
  }
  func.func @transform_2(%arg0: i32) -> (i32, i32) {
    %c0_i32 = arith.constant 0 : i32
    %c0_i32_0 = arith.constant 0 : i32
    %c0_i32_1 = arith.constant 0 : i32
    return %c0_i32, %c0_i32_0 : i32, i32
  }
  func.func @transform_3(%arg0: i32) -> (i32, i32) {
    %c0_i32 = arith.constant 0 : i32
    %c0_i32_0 = arith.constant 0 : i32
    %c0_i32_1 = arith.constant 0 : i32
    return %c0_i32, %c0_i32_0 : i32, i32
  }
  func.func @transform_4(%arg0: i32) -> (i32, i32) {
    %c0_i32 = arith.constant 0 : i32
    %c0_i32_0 = arith.constant 0 : i32
    %c0_i32_1 = arith.constant 0 : i32
    return %c0_i32, %c0_i32_0 : i32, i32
  }
  func.func @transform_5(%arg0: i32) -> (i32, i32) {
    %c0_i32 = arith.constant 0 : i32
    %c0_i32_0 = arith.constant 0 : i32
    %c0_i32_1 = arith.constant 0 : i32
    return %c0_i32, %c0_i32_0 : i32, i32
  }
  func.func @transform_6(%arg0: i32) -> (i32, i32) {
    %c0_i32 = arith.constant 0 : i32
    %c0_i32_0 = arith.constant 0 : i32
    %c0_i32_1 = arith.constant 0 : i32
    return %c0_i32, %c0_i32_0 : i32, i32
  }
  func.func @transform_7(%arg0: i32) -> (i32, i32) {
    %c0_i32 = arith.constant 0 : i32
    %c0_i32_0 = arith.constant 0 : i32
    %c0_i32_1 = arith.constant 0 : i32
    return %c0_i32, %c0_i32_0 : i32, i32
  }
  func.func @transform_8(%arg0: i32) -> (i32, i32) {
    %c0_i32 = arith.constant 0 : i32
    %c0_i32_0 = arith.constant 0 : i32
    %c0_i32_1 = arith.constant 0 : i32
    return %c0_i32, %c0_i32_0 : i32, i32
  }
  func.func @transform_9(%arg0: i32) -> (i32, i32) {
    %c0_i32 = arith.constant 0 : i32
    %c0_i32_0 = arith.constant 0 : i32
    return %arg0, %c0_i32 : i32, i32
  }
  func.func @transform_10(%arg0: i32) -> (i32, i32) {
    %c0_i32 = arith.constant 0 : i32
    %c0_i32_0 = arith.constant 0 : i32
    return %arg0, %c0_i32 : i32, i32
  }
}

</mosaic_0001>

<llo_original>
// kernel: mlp_base_forward.1
$region0: #{mlp_base_forward.1}
  #allocation0 [shape = 'u32[]', space=smem, size = 0x4, offset = 0x4, fixed_abs, tag = 'smem constant byte address 0x4 - core index']
  #allocation1 [shape = 'u32[144,128]{1,0:T(1,128)}', space=vmem, size = 0x12000, scoped, tag = 'internal scratch']
  #allocation2 [shape = 'f32[1,1]{1,0:T(1,128)S(1)}', space=vmem, size = 0x200, scoped, tag = 'scoped memory for mlp_base_forward.1']
  %s0 = inlined_call_operand.vmem [shape: f32[8,16], index: 0, kind: input, shape index: {}]
  %s1 = inlined_call_operand.vmem [shape: f32[8,4], index: 1, kind: input, shape index: {}]
  %s2 = inlined_call_operand.vmem [shape: bf16[16,256], index: 2, kind: input, shape index: {}]
  %s3 = inlined_call_operand.vmem [shape: bf16[4,256], index: 3, kind: input, shape index: {}]
  %s4 = inlined_call_operand.vmem [shape: f32[1,256], index: 4, kind: input, shape index: {}]
  %s5 = inlined_call_operand.hbm [shape: bf16[256,256], index: 5, kind: input, shape index: {}]
  %s6 = inlined_call_operand.hbm [shape: f32[1,256], index: 6, kind: input, shape index: {}]
  %s7 = inlined_call_operand.vmem [shape: f32[1,128], index: 7, kind: input, shape index: {}]
  %s8 = inlined_call_operand.<no memory space> [shape: f32[1,1], index: 8, kind: input, shape index: {}]
  %s9 = inlined_call_operand.vmem [shape: f32[8,1], index: 9, kind: output, shape index: {0}]
  %s10 = inlined_call_operand.hbm [shape: bf16[8,128], index: 10, kind: output, shape index: {1}]
  %11 = xla_tuple %s9, %s10
  %s12 = sld [smem:[#allocation0]]
  $region62: #{mlp_base_forward.1} parent=0
    _
  %s14 = ssub.s32 1, %s12
  %s15 = scalar_select 0, %s14, %s12
  %v16 = vstv %s8
  %17 = vst [vmem:[#allocation2] sm:$0x1] %v16
  $region1: #{mlp_base_forward.1} parent=0
    #allocation3 [shape = 'u8[131072]{0}', space=vmem, size = 0x20000, scoped, tag = 'input window, operand 5, single buffered']
    #allocation4 [shape = 's32[1]{0}', space=sflag, size = 0x4, scoped, tag = 'scoped memory for mlp_base_forward.1']
    #allocation5 [shape = 's32[1]{0}', space=sflag, size = 0x4, scoped, tag = 'scoped memory for mlp_base_forward.1']
    #allocation6 [shape = 'u8[1024]{0}', space=vmem, size = 0x400, scoped, tag = 'input window, operand 6, single buffered']
    #allocation7 [shape = 's32[1]{0}', space=sflag, size = 0x4, scoped, tag = 'scoped memory for mlp_base_forward.1']
    #allocation8 [shape = 'u8[2048]{0}', space=vmem, size = 0x800, scoped, tag = 'output window, operand 1, single buffered']
    %18 = vsyncpa [#allocation4], 0
    %19 = vsyncpa [#allocation7], 0
    %20 = vsyncpa [#allocation5], 0
    // Predicated region
    $region2: #{mlp_base_forward.1} parent=1 // pred_check
      _
    $region3: #{mlp_base_forward.1} parent=1 // pred_check_branch
      %22 = sbr.rel (0) target = $region5
    $region4: #{mlp_base_forward.1} parent=1 // pred_region
      _
    $region5: #{mlp_base_forward.1} parent=1 // pred_fallthru
      _
    // Predicated region
    $region6: #{mlp_base_forward.1} parent=1 // pred_check
      _
    $region7: #{mlp_base_forward.1} parent=1 // pred_check_branch
      %24 = sbr.rel (0) target = $region9
    $region8: #{mlp_base_forward.1} parent=1 // pred_region
      _
    $region9: #{mlp_base_forward.1} parent=1 // pred_fallthru
      _
    // Predicated region
    $region10: #{mlp_base_forward.1} parent=1 // pred_check
      _
    $region11: #{mlp_base_forward.1} parent=1 // pred_check_branch
      %26 = sbr.rel (0) target = $region13
    $region12: #{mlp_base_forward.1} parent=1 // pred_region
      _
    $region13: #{mlp_base_forward.1} parent=1 // pred_fallthru
      _
    // Predicated region
    $region14: #{mlp_base_forward.1} parent=1 // pred_check
      _
    $region15: #{mlp_base_forward.1} parent=1 // pred_check_branch
      %28 = sbr.rel (0) target = $region17
    $region16: #{mlp_base_forward.1} parent=1 // pred_region
      _
    $region17: #{mlp_base_forward.1} parent=1 // pred_fallthru
      _
    // Predicated region
    $region18: #{mlp_base_forward.1} parent=1 // pred_check
      _
    $region19: #{mlp_base_forward.1} parent=1 // pred_check_branch
      %30 = sbr.rel (0) target = $region21
    $region20: #{mlp_base_forward.1} parent=1 // pred_region
      _
    $region21: #{mlp_base_forward.1} parent=1 // pred_fallthru
      _
    // Predicated region
    $region22: #{mlp_base_forward.1} parent=1 // pred_check
      _
    $region23: #{mlp_base_forward.1} parent=1 // pred_check_branch
      %32 = sbr.rel (0) target = $region25
    $region24: #{mlp_base_forward.1} parent=1 // pred_region
      %s34 = ssub.s32 4096, 4096
      %35 = vsyncadd [#allocation4], %s34
      %s36 = sshll.u32 [#allocation3], 4
      %s37 = int_to_ptr.vmem [resolvable:$true] %s36
      %42 = dma.hbm_to_vmem [thread:$0]  %s5, 4096, %s37, [#allocation4], 128, 128, 8
    $region25: #{mlp_base_forward.1} parent=1 // pred_fallthru
      _
    // Predicated region
    $region26: #{mlp_base_forward.1} parent=1 // pred_check
      _
    $region27: #{mlp_base_forward.1} parent=1 // pred_check_branch
      %44 = sbr.rel (0) target = $region29
    $region28: #{mlp_base_forward.1} parent=1 // pred_region
      %s46 = ssub.s32 32, 32
      %47 = vsyncadd [#allocation7], %s46
      %s49 = sshll.u32 [#allocation6], 4
      %s50 = int_to_ptr.vmem [resolvable:$true] %s49
      %52 = dma.hbm_to_vmem [thread:$0]  %s6, 32, %s50, [#allocation7]
    $region29: #{mlp_base_forward.1} parent=1 // pred_fallthru
      _
    // Predicated region
    $region30: #{mlp_base_forward.1} parent=1 // pred_check
      _
    $region31: #{mlp_base_forward.1} parent=1 // pred_check_branch
      %54 = sbr.rel (0) target = $region33
    $region32: #{mlp_base_forward.1} parent=1 // pred_region
      _
    $region33: #{mlp_base_forward.1} parent=1 // pred_fallthru
      _
    // Predicated region
    $region34: #{mlp_base_forward.1} parent=1 // pred_check
      _
    $region35: #{mlp_base_forward.1} parent=1 // pred_check_branch
      %56 = sbr.rel (0) target = $region37
    $region36: #{mlp_base_forward.1} parent=1 // pred_region
      _
    $region37: #{mlp_base_forward.1} parent=1 // pred_fallthru
      _
    // Predicated region
    $region38: #{mlp_base_forward.1} parent=1 // pred_check
      _
    $region39: #{mlp_base_forward.1} parent=1 // pred_check_branch
      %58 = sbr.rel (0) target = $region41
    $region40: #{mlp_base_forward.1} parent=1 // pred_region
      %59 = dma.done [#allocation4], 4096
    $region41: #{mlp_base_forward.1} parent=1 // pred_fallthru
      _
    // Predicated region
    $region42: #{mlp_base_forward.1} parent=1 // pred_check
      _
    $region43: #{mlp_base_forward.1} parent=1 // pred_check_branch
      %61 = sbr.rel (0) target = $region45
    $region44: #{mlp_base_forward.1} parent=1 // pred_region
      %62 = dma.done [#allocation7], 32
    $region45: #{mlp_base_forward.1} parent=1 // pred_fallthru
      _
    %v64 = vld [vmem:[%s0] sm:$0xff]
    %v65 = vpack.c.bf16 %v64, %v64
    %v66 = vld [vmem:[%s2] sm:$0xff]
    %v67 = vld [vmem:[%s2 + $0x8] sm:$0xff]
    %v68 = vld [vmem:[%s1] sm:$0xff]
    %v69 = vpack.c.bf16 %v68, %v68
    %v70 = vld [vmem:[%s3] sm:$0xf]
    %v73 = vunpack.c.l.s4 1983009808
    %v74 = vunpack.c.0.s8 %v73
    %v75 = vlaneseq
    %v76 = vshrl.u32 %v75, 7
    %v77 = vsub.s32 %v74, %v76
    %v78 = vrot.slane %v70, %v77
    %v79 = vcombine.high %v78, %v78
    %vm80 = vcmask 31744
    %v82 = vsel %vm80, %v69, 0
    %vm84 = vcmask 1041408
    %v86 = vsel %vm84, %v78, 0
    %v89 = vsel %vm84, %v79, 0
    %91 = vmatprep.subr.bf16.mxu0 %v89
    %92 = vmatpush1.bf16.msra.mxu0 %v86
    %93 = vmatprep.subr.bf16.mxu0 0
    %94 = vmatpush1.bf16.msra.mxu0 0
    %95 = vmatprep.subr.bf16.mxu0 0
    %96 = vmatpush1.bf16.msra.mxu0 0
    %97 = vmatprep.subr.bf16.mxu0 0
    %98 = vmatpush1.bf16.msra.mxu0 0
    %99 = vmatprep.subr.bf16.mxu0 0
    %100 = vmatpush1.bf16.msra.mxu0 0
    %101 = vmatprep.subr.bf16.mxu0 0
    %102 = vmatpush1.bf16.msra.mxu0 0
    %103 = vmatprep.subr.bf16.mxu0 0
    %104 = vmatpush1.bf16.msra.mxu0 0
    %105 = vmatprep.subr.bf16.mxu0 0
    %106 = vmatpush1.bf16.msra.mxu0 0
    %107 = vmatprep.subr.bf16.mxu0 0
    %108 = vmatpush1.bf16.msra.mxu0 0
    %109 = vmatprep.subr.bf16.mxu0 0
    %110 = vmatpush1.bf16.msra.mxu0 0
    %111 = vmatprep.subr.bf16.mxu0 0
    %112 = vmatpush1.bf16.msra.mxu0 0
    %113 = vmatprep.subr.bf16.mxu0 0
    %114 = vmatpush1.bf16.msra.mxu0 0
    %115 = vmatprep.subr.bf16.mxu0 0
    %116 = vmatpush1.bf16.msra.mxu0 0
    %117 = vmatprep.subr.bf16.mxu0 0
    %118 = vmatpush1.bf16.msra.mxu0 0
    %119 = vmatprep.subr.bf16.mxu0 0
    %120 = vmatpush1.bf16.msra.mxu0 0
    %121 = vmatprep.subr.bf16.mxu0 0
    %122 = vmatpush1.bf16.msra.mxu0 0
    %123 = vmatprep.mubr.bf16.mxu0 0
    %124 = vmatmul.mubr.bf16.gmra.mrb[0].mxu0 %v82
    %v125 = vpop.f32.mrb[0].mxu0
    %v126 = vadd.f32 0.0, %v125
    %v127 = vpop.f32.mrb[0].mxu0
    %v128 = vadd.f32 0.0, %v127
    %v129 = vpop.f32.mrb[0].mxu0
    %v130 = vpop.f32.mrb[0].mxu0
    %131 = vdwg.mxu0
    %v134 = vunpack.c.l.b16 %v66
    %v135 = vunpack.c.h.b16 %v66
    %v136 = vunpack.c.l.b16 %v67
    %v137 = vunpack.c.h.b16 %v67
    %v138 = vpack.c.b16 %v136, %v134
    %v139 = vpack.c.b16 %v137, %v135
    %vm142 = vcmask 130048
    %v144 = vsel %vm142, %v65, 0
    %146 = vmatprep.subr.bf16.mxu0 %v139
    %147 = vmatpush1.bf16.msra.mxu0 %v138
    %148 = vmatprep.subr.bf16.mxu0 0
    %149 = vmatpush1.bf16.msra.mxu0 0
    %150 = vmatprep.subr.bf16.mxu0 0
    %151 = vmatpush1.bf16.msra.mxu0 0
    %152 = vmatprep.subr.bf16.mxu0 0
    %153 = vmatpush1.bf16.msra.mxu0 0
    %154 = vmatprep.subr.bf16.mxu0 0
    %155 = vmatpush1.bf16.msra.mxu0 0
    %156 = vmatprep.subr.bf16.mxu0 0
    %157 = vmatpush1.bf16.msra.mxu0 0
    %158 = vmatprep.subr.bf16.mxu0 0
    %159 = vmatpush1.bf16.msra.mxu0 0
    %160 = vmatprep.subr.bf16.mxu0 0
    %161 = vmatpush1.bf16.msra.mxu0 0
    %162 = vmatprep.subr.bf16.mxu0 0
    %163 = vmatpush1.bf16.msra.mxu0 0
    %164 = vmatprep.subr.bf16.mxu0 0
    %165 = vmatpush1.bf16.msra.mxu0 0
    %166 = vmatprep.subr.bf16.mxu0 0
    %167 = vmatpush1.bf16.msra.mxu0 0
    %168 = vmatprep.subr.bf16.mxu0 0
    %169 = vmatpush1.bf16.msra.mxu0 0
    %170 = vmatprep.subr.bf16.mxu0 0
    %171 = vmatpush1.bf16.msra.mxu0 0
    %172 = vmatprep.subr.bf16.mxu0 0
    %173 = vmatpush1.bf16.msra.mxu0 0
    %174 = vmatprep.subr.bf16.mxu0 0
    %175 = vmatpush1.bf16.msra.mxu0 0
    %176 = vmatprep.subr.bf16.mxu0 0
    %177 = vmatpush1.bf16.msra.mxu0 0
    %178 = vmatprep.mubr.bf16.mxu0 0
    %179 = vmatmul.mubr.bf16.gmra.mrb[0].mxu0 %v144
    %v180 = vpop.f32.mrb[0].mxu0
    %v181 = vadd.f32 %v126, %v180
    %v182 = vpop.f32.mrb[0].mxu0
    %v183 = vadd.f32 %v128, %v182
    %v184 = vpop.f32.mrb[0].mxu0
    %v185 = vpop.f32.mrb[0].mxu0
    %186 = vdwg.mxu0
    %v187 = vld [vmem:[%s4] sm:$0x3]
    %v189 = vlaneseq
    %v190 = vshrl.u32 %v189, 7
    %v191 = vsub.s32 0, %v190
    %v192 = vrot.slane %v187, %v191
    %v193 = vlaneseq
    %v194 = vshrl.u32 %v193, 7
    %v195 = vsub.s32 1, %v194
    %v196 = vrot.slane %v187, %v195
    %v199 = vadd.f32 %v181, %v192
    %v200 = vadd.f32 %v183, %v196
    %v201 = vpack.c.bf16 %v199, %v199
    %v202 = vpack.c.bf16 %v200, %v200
    %v203 = vtanh.bf16.pop %v201
    %v204 = vtanh.bf16.pop %v202
    %v205 = vld [vmem:[#allocation3] sm:$0xff]
    %v206 = vld [vmem:[#allocation3 + $0x8] sm:$0xff]
    %v207 = vld [vmem:[#allocation3 + $0x10] sm:$0xff]
    %v208 = vld [vmem:[#allocation3 + $0x18] sm:$0xff]
    %v209 = vld [vmem:[#allocation3 + $0x20] sm:$0xff]
    %v210 = vld [vmem:[#allocation3 + $0x28] sm:$0xff]
    %v211 = vld [vmem:[#allocation3 + $0x30] sm:$0xff]
    %v212 = vld [vmem:[#allocation3 + $0x38] sm:$0xff]
    %v213 = vld [vmem:[#allocation3 + $0x40] sm:$0xff]
    %v214 = vld [vmem:[#allocation3 + $0x48] sm:$0xff]
    %v215 = vld [vmem:[#allocation3 + $0x50] sm:$0xff]
    %v216 = vld [vmem:[#allocation3 + $0x58] sm:$0xff]
    %v217 = vld [vmem:[#allocation3 + $0x60] sm:$0xff]
    %v218 = vld [vmem:[#allocation3 + $0x68] sm:$0xff]
    %v219 = vld [vmem:[#allocation3 + $0x70] sm:$0xff]
    %v220 = vld [vmem:[#allocation3 + $0x78] sm:$0xff]
    %v221 = vld [vmem:[#allocation3 + $0x80] sm:$0xff]
    %v222 = vld [vmem:[#allocation3 + $0x88] sm:$0xff]
    %v223 = vld [vmem:[#allocation3 + $0x90] sm:$0xff]
    %v224 = vld [vmem:[#allocation3 + $0x98] sm:$0xff]
    %v225 = vld [vmem:[#allocation3 + $0xa0] sm:$0xff]
    %v226 = vld [vmem:[#allocation3 + $0xa8] sm:$0xff]
    %v227 = vld [vmem:[#allocation3 + $0xb0] sm:$0xff]
    %v228 = vld [vmem:[#allocation3 + $0xb8] sm:$0xff]
    %v229 = vld [vmem:[#allocation3 + $0xc0] sm:$0xff]
    %v230 = vld [vmem:[#allocation3 + $0xc8] sm:$0xff]
    %v231 = vld [vmem:[#allocation3 + $0xd0] sm:$0xff]
    %v232 = vld [vmem:[#allocation3 + $0xd8] sm:$0xff]
    %v233 = vld [vmem:[#allocation3 + $0xe0] sm:$0xff]
    %v234 = vld [vmem:[#allocation3 + $0xe8] sm:$0xff]
    %v235 = vld [vmem:[#allocation3 + $0xf0] sm:$0xff]
    %v236 = vld [vmem:[#allocation3 + $0xf8] sm:$0xff]
    %v237 = vld [vmem:[#allocation6] sm:$0x3]
    %v239 = vlaneseq
    %v240 = vshrl.u32 %v239, 7
    %v241 = vsub.s32 0, %v240
    %v242 = vrot.slane %v237, %v241
    %v243 = vlaneseq
    %v244 = vshrl.u32 %v243, 7
    %v245 = vsub.s32 1, %v244
    %v246 = vrot.slane %v237, %v245
    %v281 = vunpack.c.l.b16 %v205
    %v282 = vunpack.c.h.b16 %v205
    %v283 = vunpack.c.l.b16 %v206
    %v284 = vunpack.c.h.b16 %v206
    %v285 = vunpack.c.l.b16 %v207
    %v286 = vunpack.c.h.b16 %v207
    %v287 = vunpack.c.l.b16 %v208
    %v288 = vunpack.c.h.b16 %v208
    %v289 = vunpack.c.l.b16 %v209
    %v290 = vunpack.c.h.b16 %v209
    %v291 = vunpack.c.l.b16 %v210
    %v292 = vunpack.c.h.b16 %v210
    %v293 = vunpack.c.l.b16 %v211
    %v294 = vunpack.c.h.b16 %v211
    %v295 = vunpack.c.l.b16 %v212
    %v296 = vunpack.c.h.b16 %v212
    %v297 = vunpack.c.l.b16 %v213
    %v298 = vunpack.c.h.b16 %v213
    %v299 = vunpack.c.l.b16 %v214
    %v300 = vunpack.c.h.b16 %v214
    %v301 = vunpack.c.l.b16 %v215
    %v302 = vunpack.c.h.b16 %v215
    %v303 = vunpack.c.l.b16 %v216
    %v304 = vunpack.c.h.b16 %v216
    %v305 = vunpack.c.l.b16 %v217
    %v306 = vunpack.c.h.b16 %v217
    %v307 = vunpack.c.l.b16 %v218
    %v308 = vunpack.c.h.b16 %v218
    %v309 = vunpack.c.l.b16 %v219
    %v310 = vunpack.c.h.b16 %v219
    %v311 = vunpack.c.l.b16 %v220
    %v312 = vunpack.c.h.b16 %v220
    %v313 = vunpack.c.l.b16 %v221
    %v314 = vunpack.c.h.b16 %v221
    %v315 = vunpack.c.l.b16 %v222
    %v316 = vunpack.c.h.b16 %v222
    %v317 = vunpack.c.l.b16 %v223
    %v318 = vunpack.c.h.b16 %v223
    %v319 = vunpack.c.l.b16 %v224
    %v320 = vunpack.c.h.b16 %v224
    %v321 = vunpack.c.l.b16 %v225
    %v322 = vunpack.c.h.b16 %v225
    %v323 = vunpack.c.l.b16 %v226
    %v324 = vunpack.c.h.b16 %v226
    %v325 = vunpack.c.l.b16 %v227
    %v326 = vunpack.c.h.b16 %v227
    %v327 = vunpack.c.l.b16 %v228
    %v328 = vunpack.c.h.b16 %v228
    %v329 = vunpack.c.l.b16 %v229
    %v330 = vunpack.c.h.b16 %v229
    %v331 = vunpack.c.l.b16 %v230
    %v332 = vunpack.c.h.b16 %v230
    %v333 = vunpack.c.l.b16 %v231
    %v334 = vunpack.c.h.b16 %v231
    %v335 = vunpack.c.l.b16 %v232
    %v336 = vunpack.c.h.b16 %v232
    %v337 = vunpack.c.l.b16 %v233
    %v338 = vunpack.c.h.b16 %v233
    %v339 = vunpack.c.l.b16 %v234
    %v340 = vunpack.c.h.b16 %v234
    %v341 = vunpack.c.l.b16 %v235
    %v342 = vunpack.c.h.b16 %v235
    %v343 = vunpack.c.l.b16 %v236
    %v344 = vunpack.c.h.b16 %v236
    %v345 = vpack.c.b16 %v283, %v281
    %v346 = vpack.c.b16 %v284, %v282
    %v347 = vpack.c.b16 %v287, %v285
    %v348 = vpack.c.b16 %v288, %v286
    %v349 = vpack.c.b16 %v291, %v289
    %v350 = vpack.c.b16 %v292, %v290
    %v351 = vpack.c.b16 %v295, %v293
    %v352 = vpack.c.b16 %v296, %v294
    %v353 = vpack.c.b16 %v299, %v297
    %v354 = vpack.c.b16 %v300, %v298
    %v355 = vpack.c.b16 %v303, %v301
    %v356 = vpack.c.b16 %v304, %v302
    %v357 = vpack.c.b16 %v307, %v305
    %v358 = vpack.c.b16 %v308, %v306
    %v359 = vpack.c.b16 %v311, %v309
    %v360 = vpack.c.b16 %v312, %v310
    %v361 = vpack.c.b16 %v315, %v313
    %v362 = vpack.c.b16 %v316, %v314
    %v363 = vpack.c.b16 %v319, %v317
    %v364 = vpack.c.b16 %v320, %v318
    %v365 = vpack.c.b16 %v323, %v321
    %v366 = vpack.c.b16 %v324, %v322
    %v367 = vpack.c.b16 %v327, %v325
    %v368 = vpack.c.b16 %v328, %v326
    %v369 = vpack.c.b16 %v331, %v329
    %v370 = vpack.c.b16 %v332, %v330
    %v371 = vpack.c.b16 %v335, %v333
    %v372 = vpack.c.b16 %v336, %v334
    %v373 = vpack.c.b16 %v339, %v337
    %v374 = vpack.c.b16 %v340, %v338
    %v375 = vpack.c.b16 %v343, %v341
    %v376 = vpack.c.b16 %v344, %v342
    %409 = vmatprep.subr.bf16.mxu0 %v346
    %410 = vmatpush1.bf16.msra.mxu0 %v345
    %411 = vmatprep.subr.bf16.mxu0 %v348
    %412 = vmatpush1.bf16.msra.mxu0 %v347
    %413 = vmatprep.subr.bf16.mxu0 %v350
    %414 = vmatpush1.bf16.msra.mxu0 %v349
    %415 = vmatprep.subr.bf16.mxu0 %v352
    %416 = vmatpush1.bf16.msra.mxu0 %v351
    %417 = vmatprep.subr.bf16.mxu0 %v354
    %418 = vmatpush1.bf16.msra.mxu0 %v353
    %419 = vmatprep.subr.bf16.mxu0 %v356
    %420 = vmatpush1.bf16.msra.mxu0 %v355
    %421 = vmatprep.subr.bf16.mxu0 %v358
    %422 = vmatpush1.bf16.msra.mxu0 %v357
    %423 = vmatprep.subr.bf16.mxu0 %v360
    %424 = vmatpush1.bf16.msra.mxu0 %v359
    %425 = vmatprep.subr.bf16.mxu0 %v362
    %426 = vmatpush1.bf16.msra.mxu0 %v361
    %427 = vmatprep.subr.bf16.mxu0 %v364
    %428 = vmatpush1.bf16.msra.mxu0 %v363
    %429 = vmatprep.subr.bf16.mxu0 %v366
    %430 = vmatpush1.bf16.msra.mxu0 %v365
    %431 = vmatprep.subr.bf16.mxu0 %v368
    %432 = vmatpush1.bf16.msra.mxu0 %v367
    %433 = vmatprep.subr.bf16.mxu0 %v370
    %434 = vmatpush1.bf16.msra.mxu0 %v369
    %435 = vmatprep.subr.bf16.mxu0 %v372
    %436 = vmatpush1.bf16.msra.mxu0 %v371
    %437 = vmatprep.subr.bf16.mxu0 %v374
    %438 = vmatpush1.bf16.msra.mxu0 %v373
    %439 = vmatprep.subr.bf16.mxu0 %v376
    %440 = vmatpush1.bf16.msra.mxu0 %v375
    %441 = vmatprep.mubr.bf16.mxu0 %v204
    %442 = vmatmul.mubr.bf16.gmra.mrb[0].mxu0 %v203
    %v443 = vpop.f32.mrb[0].mxu0
    %v444 = vadd.f32 %v242, %v443
    %v445 = vpop.f32.mrb[0].mxu0
    %v446 = vadd.f32 %v246, %v445
    %v447 = vpop.f32.mrb[0].mxu0
    %v448 = vpop.f32.mrb[0].mxu0
    %449 = vdwg.mxu0
    %v450 = vpack.c.bf16 %v444, %v444
    %v451 = vpack.c.bf16 %v446, %v446
    %v452 = vtanh.bf16.pop %v450
    %v453 = vtanh.bf16.pop %v451
    %v454 = vunpack.c.l.bf16 %v452
    %v455 = vld [vmem:[%s7] sm:$0x1]
    %v457 = vlaneseq
    %v458 = vshrl.u32 %v457, 7
    %v459 = vsub.s32 0, %v458
    %v460 = vrot.slane %v455, %v459
    %v462 = vmul.f32 %v454, %v460
    %463 = vadd.xlane.f32.xlu0 %v462
    %v464 = vpop.xlane.xlu0 %463
    %v465 = vld [vmem:[#allocation2] sm:$0x1]
    %v467 = vlaneseq
    %v468 = vshrl.u32 %v467, 7
    %v469 = vsub.s32 0, %v468
    %v470 = vrot.slane %v465, %v469
    %v472 = vadd.f32 %v464, %v470
    %vm473 = vcmask 7168
    %474 = vst.msk [vmem:[%s9] sm:$0xff] %vm473, %v472
    %475 = vst [vmem:[#allocation8] sm:$0xf] %v453
    // Predicated region
    $region46: #{mlp_base_forward.1} parent=1 // pred_check
      _
    $region47: #{mlp_base_forward.1} parent=1 // pred_check_branch
      %477 = sbr.rel (0) target = $region49
    $region48: #{mlp_base_forward.1} parent=1 // pred_region
      _
    $region49: #{mlp_base_forward.1} parent=1 // pred_fallthru
      _
    // Predicated region
    $region50: #{mlp_base_forward.1} parent=1 // pred_check
      _
    $region51: #{mlp_base_forward.1} parent=1 // pred_check_branch
      %479 = sbr.rel (0) target = $region53
    $region52: #{mlp_base_forward.1} parent=1 // pred_region
      %s481 = ssub.s32 64, 64
      %482 = vsyncadd [#allocation5], %s481
      %s484 = sshll.u32 [#allocation8], 4
      %s485 = int_to_ptr.vmem [resolvable:$true] %s484
      %487 = dma.vmem_to_hbm [thread:$0]  %s485, 64, %s10, [#allocation5]
    $region53: #{mlp_base_forward.1} parent=1 // pred_fallthru
      _
    // Predicated region
    $region54: #{mlp_base_forward.1} parent=1 // pred_check
      _
    $region55: #{mlp_base_forward.1} parent=1 // pred_check_branch
      %489 = sbr.rel (0) target = $region57
    $region56: #{mlp_base_forward.1} parent=1 // pred_region
      _
    $region57: #{mlp_base_forward.1} parent=1 // pred_fallthru
      _
    // Predicated region
    $region58: #{mlp_base_forward.1} parent=1 // pred_check
      _
    $region59: #{mlp_base_forward.1} parent=1 // pred_check_branch
      %491 = sbr.rel (0) target = $region61
    $region60: #{mlp_base_forward.1} parent=1 // pred_region
      %492 = dma.done [#allocation5], 64
    $region61: #{mlp_base_forward.1} parent=1 // pred_fallthru
      _
    %493 = vsyncpa [#allocation4], 1
    %494 = vsyncpa [#allocation7], 1
    %495 = vsyncpa [#allocation5], 1

</llo_original>
